<compile_context>
chip_gen: v6e
topology: v6e:2x2x1
jax: 0.10.0
libtpu: 0.0.40
codegen_flags: <defaults>
</compile_context>

<pallas_src>
import functools

import jax
import jax.numpy as jnp
from jax.experimental import pallas as pl
from jax.experimental.pallas import tpu as pltpu

_NEG_BIG = -10000000000.0
_VMEM_BUDGET_BYTES = 30 * 1024 * 1024   # conservative working-set budget (fits v5e/v6e/v7x)
_VMEM_LIMIT_BYTES = 48 * 1024 * 1024    # scoped VMEM limit (< 64 MiB physical on v7x)


def _pick_row_tile(n, block_m=None):
    """Query-row tile TM.  Second-minor block dims must be a multiple of the
    native sublane tiling (we round to 32 to stay safe for int8 adj) or equal
    the full array extent."""
    if block_m is not None:
        tm = min(int(block_m), n)
    elif n <= 512:
        tm = n
    else:
        # adj double-buffer (2x) + bias scratch (1x) + e/p temporaries (~3x), f32
        per_row = 6 * n * 4
        tm = min(_VMEM_BUDGET_BYTES // per_row, 512, n)
    if tm < n:
        tm = max(32, tm - (tm % 32))
    return int(tm)


def _block_diag(l2d):
    """(H, F) -> block-diagonal (H*F, H); column h holds head h's attention vector."""
    h, f = l2d.shape
    eye = jnp.eye(h, dtype=l2d.dtype)
    return (l2d[:, :, None] * eye[:, None, :]).reshape(h * f, h)


# ----------------------------------------------------------------------------
# Kernel 1: projection + all-head attention logits (row-tiled).
# ----------------------------------------------------------------------------
def _gat_project_kernel(x_ref, w_ref, li_ref, lj_ref, wh_ref, ai_ref, aj_ref):
    x = x_ref[...].astype(jnp.float32)                     # (TM, Din)
    w = w_ref[...].astype(jnp.float32)                     # (Din, H*F)
    wh = jnp.dot(x, w, preferred_element_type=jnp.float32)  # (TM, H*F)
    wh_ref[...] = wh
    # Block-diagonal matmuls compute every head's logit contribution at once.
    ai_ref[...] = jnp.dot(wh, li_ref[...].astype(jnp.float32),
                          preferred_element_type=jnp.float32)   # (TM, H)
    aj_ref[...] = jnp.dot(wh, lj_ref[...].astype(jnp.float32),
                          preferred_element_type=jnp.float32)   # (TM, H)


# ----------------------------------------------------------------------------
# Kernel 2: masked softmax attention + aggregation for one (row tile, head).
# ----------------------------------------------------------------------------
def _gat_attention_kernel(ai_ref, aj_ref, wh_ref, adj_ref, out_ref, bias_ref,
                          *, alpha):
    h = pl.program_id(1)

    # Hoist the adjacency bias once per row tile; reused across all heads
    # (head axis is innermost + "arbitrary", so h==0 always runs first and the
    # adj block is not re-fetched while the block index stays the same).
    @pl.when(h == 0)
    def _():
        bias_ref[...] = _NEG_BIG * (1.0 - adj_ref[...].astype(jnp.float32))

    ai = ai_ref[0].astype(jnp.float32)     # (TM, 1)  target-node logits
    aj = aj_ref[0].astype(jnp.float32)     # (1, N)   source-node logits
    wh = wh_ref[0].astype(jnp.float32)     # (N, F)   this head's projected features

    # e[i, j] = leaky_relu(ai[i] + aj[j]) + (-1e10) * (1 - adj[i, j])
    e = ai + aj                                         # (TM, N)
    e = jnp.where(e >= 0, e, alpha * e) + bias_ref[...]

    # Numerically-stable softmax over source nodes j (lane axis).  The 1/sum is
    # folded into the (TM, F) aggregated output instead of the (TM, N) probs,
    # and the divide goes to the EUP slot via the approximate reciprocal.
    e = e - jnp.max(e, axis=1, keepdims=True)
    p = jnp.exp(e)
    inv = pl.reciprocal(jnp.sum(p, axis=1, keepdims=True), approx=True)  # (TM, 1)

    agg = jnp.dot(p, wh, preferred_element_type=jnp.float32)             # (TM, F)
    out_ref[0] = (agg * inv).astype(out_ref.dtype)


# ----------------------------------------------------------------------------
# Wrapper
# ----------------------------------------------------------------------------
def graph_attention_layer(x, adj, weight, linear_i, linear_j,
                          *, nheads, out_features, alpha, concat=True,
                          block_m=None):
    """Forward pass of GraphAttentionLayer (inference mode, dropout = identity).

    x:        (N, in_features)
    adj:      (N, N) adjacency; may be f32, bf16, int8 or bool (0/1 values).
              Low-precision adj cuts the dominant HBM stream 4x; pass f32 if
              adjacency carries non-binary weights.
    weight:   (in_features, nheads * out_features)
    linear_i: (1, nheads, out_features)
    linear_j: (1, nheads, out_features)
    """
    # TODO(synk): training-mode dropout on x is not implemented (eval mode only).
    n, din = x.shape
    h, f = nheads, out_features
    hf = h * f

    li_blk = _block_diag(linear_i.reshape(h, f).astype(jnp.float32))  # (H*F, H)
    lj_blk = _block_diag(linear_j.reshape(h, f).astype(jnp.float32))  # (H*F, H)

    tm = _pick_row_tile(n, block_m)
    num_row_tiles = pl.cdiv(n, tm)

    # ---- projection + all-head logits, tiled over rows -------------------
    wh, ai, aj = pl.pallas_call(
        _gat_project_kernel,
        grid=(num_row_tiles,),
        in_specs=[
            pl.BlockSpec((tm, din), lambda i: (i, 0)),
            pl.BlockSpec((din, hf), lambda i: (0, 0)),
            pl.BlockSpec((hf, h), lambda i: (0, 0)),
            pl.BlockSpec((hf, h), lambda i: (0, 0)),
        ],
        out_specs=(
            pl.BlockSpec((tm, hf), lambda i: (i, 0)),
            pl.BlockSpec((tm, h), lambda i: (i, 0)),
            pl.BlockSpec((tm, h), lambda i: (i, 0)),
        ),
        out_shape=(
            jax.ShapeDtypeStruct((n, hf), jnp.float32),
            jax.ShapeDtypeStruct((n, h), jnp.float32),
            jax.ShapeDtypeStruct((n, h), jnp.float32),
        ),
        compiler_params=pltpu.CompilerParams(
            dimension_semantics=("parallel",)),
    )(x, weight, li_blk, lj_blk)

    # Head-major layout plumbing (tiny O(N*H*F) XLA ops, not the hot path).
    wh_hnf = jnp.transpose(wh.reshape(n, h, f), (1, 0, 2))   # (H, N, F)
    ai_h = ai.T.reshape(h, n, 1)                              # (H, N, 1)
    aj_h = aj.T.reshape(h, 1, n)                              # (H, 1, N)

    # ---- attention: grid over (row tiles, heads) --------------------------
    out_hnf = pl.pallas_call(
        functools.partial(_gat_attention_kernel, alpha=alpha),
        grid=(num_row_tiles, h),
        in_specs=[
            pl.BlockSpec((1, tm, 1), lambda i, hh: (hh, i, 0)),   # ai tile
            pl.BlockSpec((1, 1, n), lambda i, hh: (hh, 0, 0)),    # aj (all sources)
            pl.BlockSpec((1, n, f), lambda i, hh: (hh, 0, 0)),    # wh (all sources)
            pl.BlockSpec((tm, n), lambda i, hh: (i, 0)),          # adj row tile
        ],
        out_specs=pl.BlockSpec((1, tm, f), lambda i, hh: (hh, i, 0)),
        out_shape=jax.ShapeDtypeStruct((h, n, f), jnp.float32),
        scratch_shapes=[pltpu.VMEM((tm, n), jnp.float32)],        # adjacency bias
        compiler_params=pltpu.CompilerParams(
            # rows shard across TensorCores; heads stay sequential per core so
            # the pl.when(h == 0) bias scratch and adj-tile reuse are valid.
            dimension_semantics=("parallel", "arbitrary"),
            vmem_limit_bytes=_VMEM_LIMIT_BYTES),
    )(ai_h, aj_h, wh_hnf, adj)

    out = jnp.transpose(out_hnf, (1, 0, 2)).reshape(n, hf)    # (N, H*F)
    if concat:
        return out
    return out.reshape(n, h, f).mean(axis=1)


# ----------------------------------------------------------------------------
# Pure-JAX reference (mirrors the PyTorch forward exactly, eval mode).
# ----------------------------------------------------------------------------
def gat_reference(x, adj, weight, linear_i, linear_j,
                  *, nheads, out_features, alpha, concat=True):
    wh = (x @ weight).reshape(-1, nheads, out_features)          # (N, H, F)
    awh_i = jnp.sum(wh * linear_i, axis=2)[:, None, :]           # (N, 1, H)
    awh_j = jnp.sum(wh * linear_j, axis=2)[None, :, :]           # (1, N, H)
    mask = (_NEG_BIG * (1.0 - adj))[:, :, None]                  # (N, N, 1)
    e = jax.nn.leaky_relu(awh_i + awh_j, negative_slope=alpha) + mask
    a = jax.nn.softmax(e, axis=1)[:, :, :, None]                 # (N, N, H, 1)
    out = jnp.sum(a * wh[None], axis=1)                          # (N, H, F)
    if concat:
        return out.reshape(out.shape[0], -1)
    return out.mean(axis=1)


def xavier_uniform(key, shape, gain):
    if len(shape) == 2:
        fan_in, fan_out = shape[0], shape[1]
    else:
        rf = 1
        for s in shape[2:]:
            rf *= s
        fan_in, fan_out = shape[1] * rf, shape[0] * rf
    bound = gain * (6.0 / (fan_in + fan_out)) ** 0.5
    return jax.random.uniform(key, shape, jnp.float32, -bound, bound)


if __name__ == "__main__":
    # Small shapes, but big enough to exercise multi-tile rows (grid = (2, 4)).
    N = 256
    in_features = 32
    out_features = 8
    nheads = 4
    alpha = 0.2
    gain = (2.0 / (1.0 + 0.01 ** 2)) ** 0.5   # calculate_gain('leaky_relu')

    key = jax.random.PRNGKey(0)
    kx, kadj, kw, ki, kj = jax.random.split(key, 5)

    x = jax.random.normal(kx, (N, in_features), jnp.float32)
    adj = (jax.random.uniform(kadj, (N, N)) > 0.7).astype(jnp.float32)
    adj = jnp.maximum(adj, jnp.eye(N, dtype=jnp.float32))   # self-loops

    weight = xavier_uniform(kw, (in_features, nheads * out_features), gain)
    linear_i = xavier_uniform(ki, (1, nheads, out_features), gain)
    linear_j = xavier_uniform(kj, (1, nheads, out_features), gain)

    # int8 adjacency for the kernel (4x less HBM traffic); reference stays f32.
    out = graph_attention_layer(
        x, adj.astype(jnp.int8), weight, linear_i, linear_j,
        nheads=nheads, out_features=out_features, alpha=alpha,
        concat=True, block_m=128)
    out = jax.block_until_ready(out)

    ref = gat_reference(
        x, adj, weight, linear_i, linear_j,
        nheads=nheads, out_features=out_features, alpha=alpha, concat=True)

    assert out.shape == (N, nheads * out_features)
    # Tolerance loosened slightly vs f32-exact because of pl.reciprocal(approx=True).
    err = jnp.max(jnp.abs(out - ref))
    assert jnp.allclose(out, ref, atol=2e-3, rtol=2e-3), f"max abs err = {err}"

    # Also check the head-averaging (concat=False) branch.
    out_mean = graph_attention_layer(
        x, adj.astype(jnp.int8), weight, linear_i, linear_j,
        nheads=nheads, out_features=out_features, alpha=alpha,
        concat=False, block_m=128)
    out_mean = jax.block_until_ready(out_mean)
    ref_mean = gat_reference(
        x, adj, weight, linear_i, linear_j,
        nheads=nheads, out_features=out_features, alpha=alpha, concat=False)
    assert jnp.allclose(out_mean, ref_mean, atol=2e-3, rtol=2e-3)

    print("KERNEL_OK")
</pallas_src>

<mosaic_0001>
module attributes {stable_mosaic.version = 11 : i64} {
  func.func @_gat_project_kernel(%arg0: i32, %arg1: memref<128x32xf32, #tpu.memory_space<vmem>>, %arg2: memref<32x32xf32, #tpu.memory_space<vmem>>, %arg3: memref<32x4xf32, #tpu.memory_space<vmem>>, %arg4: memref<32x4xf32, #tpu.memory_space<vmem>>, %arg5: memref<128x32xf32, #tpu.memory_space<vmem>>, %arg6: memref<128x4xf32, #tpu.memory_space<vmem>>, %arg7: memref<128x4xf32, #tpu.memory_space<vmem>>) attributes {dimension_semantics = [#tpu.dimension_semantics<parallel>], iteration_bounds = array<i64: 2>, scalar_prefetch = 0 : i64, scratch_operands = 0 : i64, tpu.core_type = #tpu.core_type<tc>, window_params = [{transform_indices = @transform_0, window_bounds = array<i64: 128, 32>}, {pipeline_mode = #tpu.pipeline_mode<synchronous>, transform_indices = @transform_1, window_bounds = array<i64: 32, 32>}, {pipeline_mode = #tpu.pipeline_mode<synchronous>, transform_indices = @transform_2, window_bounds = array<i64: 32, 4>}, {pipeline_mode = #tpu.pipeline_mode<synchronous>, transform_indices = @transform_3, window_bounds = array<i64: 32, 4>}, {transform_indices = @transform_4, window_bounds = array<i64: 128, 32>}, {transform_indices = @transform_5, window_bounds = array<i64: 128, 4>}, {transform_indices = @transform_6, window_bounds = array<i64: 128, 4>}]} {
    %c0 = arith.constant 0 : index
    %c0_0 = arith.constant 0 : index
    %0 = vector.load %arg1[%c0, %c0_0] : memref<128x32xf32, #tpu.memory_space<vmem>>, vector<128x32xf32>
    %c0_1 = arith.constant 0 : index
    %c0_2 = arith.constant 0 : index
    %1 = vector.load %arg2[%c0_1, %c0_2] : memref<32x32xf32, #tpu.memory_space<vmem>>, vector<32x32xf32>
    %cst = arith.constant dense<0.000000e+00> : vector<128x32xf32>
    %2 = tpu.matmul %0, %1, %cst {dimension_numbers = #tpu.dot_dimension_numbers<[1], [0], [0], [1], [0, 0, 1, 1], [], []>} : vector<128x32xf32>, vector<32x32xf32>, vector<128x32xf32> -> vector<128x32xf32>
    %c0_3 = arith.constant 0 : index
    %c0_4 = arith.constant 0 : index
    %3 = vector.load %arg5[%c0_3, %c0_4] : memref<128x32xf32, #tpu.memory_space<vmem>>, vector<128x32xf32>
    tpu.vector_store %arg5[%c0_3, %c0_4], %2 {strides = array<i32>} : memref<128x32xf32, #tpu.memory_space<vmem>>, vector<128x32xf32>,
    %c0_5 = arith.constant 0 : index
    %c0_6 = arith.constant 0 : index
    %4 = vector.load %arg3[%c0_5, %c0_6] : memref<32x4xf32, #tpu.memory_space<vmem>>, vector<32x4xf32>
    %cst_7 = arith.constant dense<0.000000e+00> : vector<128x4xf32>
    %5 = tpu.matmul %2, %4, %cst_7 {dimension_numbers = #tpu.dot_dimension_numbers<[1], [0], [0], [1], [0, 0, 1, 1], [], []>} : vector<128x32xf32>, vector<32x4xf32>, vector<128x4xf32> -> vector<128x4xf32>
    %c0_8 = arith.constant 0 : index
    %c0_9 = arith.constant 0 : index
    %6 = vector.load %arg6[%c0_8, %c0_9] : memref<128x4xf32, #tpu.memory_space<vmem>>, vector<128x4xf32>
    tpu.vector_store %arg6[%c0_8, %c0_9], %5 {strides = array<i32>} : memref<128x4xf32, #tpu.memory_space<vmem>>, vector<128x4xf32>,
    %c0_10 = arith.constant 0 : index
    %c0_11 = arith.constant 0 : index
    %7 = vector.load %arg4[%c0_10, %c0_11] : memref<32x4xf32, #tpu.memory_space<vmem>>, vector<32x4xf32>
    %cst_12 = arith.constant dense<0.000000e+00> : vector<128x4xf32>
    %8 = tpu.matmul %2, %7, %cst_12 {dimension_numbers = #tpu.dot_dimension_numbers<[1], [0], [0], [1], [0, 0, 1, 1], [], []>} : vector<128x32xf32>, vector<32x4xf32>, vector<128x4xf32> -> vector<128x4xf32>
    %c0_13 = arith.constant 0 : index
    %c0_14 = arith.constant 0 : index
    %9 = vector.load %arg7[%c0_13, %c0_14] : memref<128x4xf32, #tpu.memory_space<vmem>>, vector<128x4xf32>
    tpu.vector_store %arg7[%c0_13, %c0_14], %8 {strides = array<i32>} : memref<128x4xf32, #tpu.memory_space<vmem>>, vector<128x4xf32>,
    return
  }
  func.func @transform_0(%arg0: i32) -> (i32, i32) {
    %c0_i32 = arith.constant 0 : i32
    %c0_i32_0 = arith.constant 0 : i32
    return %arg0, %c0_i32 : i32, i32
  }
  func.func @transform_1(%arg0: i32) -> (i32, i32) {
    %c0_i32 = arith.constant 0 : i32
    %c0_i32_0 = arith.constant 0 : i32
    %c0_i32_1 = arith.constant 0 : i32
    return %c0_i32, %c0_i32_0 : i32, i32
  }
  func.func @transform_2(%arg0: i32) -> (i32, i32) {
    %c0_i32 = arith.constant 0 : i32
    %c0_i32_0 = arith.constant 0 : i32
    %c0_i32_1 = arith.constant 0 : i32
    return %c0_i32, %c0_i32_0 : i32, i32
  }
  func.func @transform_3(%arg0: i32) -> (i32, i32) {
    %c0_i32 = arith.constant 0 : i32
    %c0_i32_0 = arith.constant 0 : i32
    %c0_i32_1 = arith.constant 0 : i32
    return %c0_i32, %c0_i32_0 : i32, i32
  }
  func.func @transform_4(%arg0: i32) -> (i32, i32) {
    %c0_i32 = arith.constant 0 : i32
    %c0_i32_0 = arith.constant 0 : i32
    return %arg0, %c0_i32 : i32, i32
  }
  func.func @transform_5(%arg0: i32) -> (i32, i32) {
    %c0_i32 = arith.constant 0 : i32
    %c0_i32_0 = arith.constant 0 : i32
    return %arg0, %c0_i32 : i32, i32
  }
  func.func @transform_6(%arg0: i32) -> (i32, i32) {
    %c0_i32 = arith.constant 0 : i32
    %c0_i32_0 = arith.constant 0 : i32
    return %arg0, %c0_i32 : i32, i32
  }
}

</mosaic_0001>

<llo_original>
// kernel: tpu_custom_call.1
$region0: #{tpu_custom_call.1}
  #allocation0 [shape = 'u32[]', space=smem, size = 0x4, offset = 0x4, fixed_abs, tag = 'smem constant byte address 0x4 - core index']
  #allocation1 [shape = 'u32[144,128]{1,0:T(1,128)}', space=vmem, size = 0x12000, scoped, tag = 'internal scratch']
  %s0 = inlined_call_operand.vmem [shape: f32[256,32], index: 0, kind: input, shape index: {}]
  %s1 = inlined_call_operand.vmem [shape: f32[32,32], index: 1, kind: input, shape index: {}]
  %s2 = inlined_call_operand.vmem [shape: f32[32,4], index: 2, kind: input, shape index: {}]
  %s3 = inlined_call_operand.vmem [shape: f32[32,4], index: 3, kind: input, shape index: {}]
  %s4 = inlined_call_operand.vmem [shape: f32[256,32], index: 4, kind: output, shape index: {0}]
  %s5 = inlined_call_operand.vmem [shape: f32[256,4], index: 5, kind: output, shape index: {1}]
  %s6 = inlined_call_operand.vmem [shape: f32[256,4], index: 6, kind: output, shape index: {2}]
  %7 = xla_tuple %s4, %s5, %s6
  %s8 = sld [smem:[#allocation0]]
  $region65: #{tpu_custom_call.1} parent=0
    _
  %s10 = ssub.s32 1, %s8
  %s11 = scalar_select 0, %s10, %s8
  loop: start=0, step=1, limit=4
  $region2: #{tpu_custom_call.1} parent=0 // loop_pre_header
    _
  $region3: #{tpu_custom_call.1} parent=0 // loop_header
    %s13 = sphi 0, %s17
    %p14 = scmp.ge.s32.totalorder %s13, 4
    %s23 = sphi 0, %s25
    %s26 = sphi 0, %s23
    %s27 = sphi 0, %s26
    %s43 = sphi 0, %s27
    %s47 = sphi 0, %s47
    %s49 = sphi 0, %s47
    %s50 = sphi 0, %s49
    %s64 = sphi 0, %s50
    %s68 = sphi 0, %s68
    %s70 = sphi 0, %s68
    %s71 = sphi 0, %s70
    %s85 = sphi 0, %s71
    %s89 = sphi 0, %s89
    %s91 = sphi 0, %s89
    %s92 = sphi 0, %s91
    %s106 = sphi 0, %s92
    %s112 = sphi 0, %s114
    %s115 = sphi 0, %s112
    %s116 = sphi 0, %s115
    %s132 = sphi 0, %s116
    %s138 = sphi 0, %s140
    %s141 = sphi 0, %s138
    %s142 = sphi 0, %s141
    %s158 = sphi 0, %s142
    %s164 = sphi 0, %s166
    %s167 = sphi 0, %s164
    %s168 = sphi 0, %s167
    %s184 = sphi 0, %s168
  $region4: #{tpu_custom_call.1} parent=0 // loop_header_branch
    %16 = sbr.rel (%p14) target = $region8
  $region5: #{tpu_custom_call.1} parent=0 // loop_body
    %s18 = ssub.s32 %s13, 1
    %s19 = ssub.s32 %s13, 2
    %s20 = sadd.s32 %s13, 1
    %s21 = ssub.s32 %s13, %s20
    %p22 = scmp.eq.s32.totalorder %s21, 0
    %s24 = sadd.s32 %s23, 1
    %s25 = scalar_select %p22, %s23, %s24
    %p28 = pneg %p22
    %p29 = scmp.eq.s32.totalorder %s13, 1
    %p30 = por %p28, %p29
    %p31 = scmp.ne.s32.totalorder %s23, %s26
    %p32 = scmp.eq.s32.totalorder %s13, 0
    %p33 = por %p31, %p32
    %p34 = scmp.ne.s32.totalorder %s23, %s26
    %p35 = scmp.eq.s32.totalorder %s18, 1
    %p36 = por %p34, %p35
    %p37 = scmp.ne.s32.totalorder %s26, %s27
    %p38 = scmp.eq.s32.totalorder %s18, 0
    %p39 = por %p37, %p38
    %p40 = scmp.ne.s32.totalorder %s26, %s27
    %p41 = scmp.eq.s32.totalorder %s19, 1
    %p42 = por %p40, %p41
    %p44 = scmp.ne.s32.totalorder %s27, %s43
    %p45 = scmp.eq.s32.totalorder %s19, 0
    %p46 = por %p44, %p45
    %s48 = sadd.s32 %s47, 1
    %p51 = scmp.eq.s32.totalorder %s13, 1
    %p52 = scmp.ne.s32.totalorder %s47, %s49
    %p53 = scmp.eq.s32.totalorder %s13, 0
    %p54 = por %p52, %p53
    %p55 = scmp.ne.s32.totalorder %s47, %s49
    %p56 = scmp.eq.s32.totalorder %s18, 1
    %p57 = por %p55, %p56
    %p58 = scmp.ne.s32.totalorder %s49, %s50
    %p59 = scmp.eq.s32.totalorder %s18, 0
    %p60 = por %p58, %p59
    %p61 = scmp.ne.s32.totalorder %s49, %s50
    %p62 = scmp.eq.s32.totalorder %s19, 1
    %p63 = por %p61, %p62
    %p65 = scmp.ne.s32.totalorder %s50, %s64
    %p66 = scmp.eq.s32.totalorder %s19, 0
    %p67 = por %p65, %p66
    %s69 = sadd.s32 %s68, 1
    %p72 = scmp.eq.s32.totalorder %s13, 1
    %p73 = scmp.ne.s32.totalorder %s68, %s70
    %p74 = scmp.eq.s32.totalorder %s13, 0
    %p75 = por %p73, %p74
    %p76 = scmp.ne.s32.totalorder %s68, %s70
    %p77 = scmp.eq.s32.totalorder %s18, 1
    %p78 = por %p76, %p77
    %p79 = scmp.ne.s32.totalorder %s70, %s71
    %p80 = scmp.eq.s32.totalorder %s18, 0
    %p81 = por %p79, %p80
    %p82 = scmp.ne.s32.totalorder %s70, %s71
    %p83 = scmp.eq.s32.totalorder %s19, 1
    %p84 = por %p82, %p83
    %p86 = scmp.ne.s32.totalorder %s71, %s85
    %p87 = scmp.eq.s32.totalorder %s19, 0
    %p88 = por %p86, %p87
    %s90 = sadd.s32 %s89, 1
    %p93 = scmp.eq.s32.totalorder %s13, 1
    %p94 = scmp.ne.s32.totalorder %s89, %s91
    %p95 = scmp.eq.s32.totalorder %s13, 0
    %p96 = por %p94, %p95
    %p97 = scmp.ne.s32.totalorder %s89, %s91
    %p98 = scmp.eq.s32.totalorder %s18, 1
    %p99 = por %p97, %p98
    %p100 = scmp.ne.s32.totalorder %s91, %s92
    %p101 = scmp.eq.s32.totalorder %s18, 0
    %p102 = por %p100, %p101
    %p103 = scmp.ne.s32.totalorder %s91, %s92
    %p104 = scmp.eq.s32.totalorder %s19, 1
    %p105 = por %p103, %p104
    %p107 = scmp.ne.s32.totalorder %s92, %s106
    %p108 = scmp.eq.s32.totalorder %s19, 0
    %p109 = por %p107, %p108
    %s110 = ssub.s32 %s13, %s20
    %p111 = scmp.eq.s32.totalorder %s110, 0
    %s113 = sadd.s32 %s112, 1
    %s114 = scalar_select %p111, %s112, %s113
    %p117 = pneg %p111
    %p118 = scmp.eq.s32.totalorder %s13, 1
    %p119 = por %p117, %p118
    %p120 = scmp.ne.s32.totalorder %s112, %s115
    %p121 = scmp.eq.s32.totalorder %s13, 0
    %p122 = por %p120, %p121
    %p123 = scmp.ne.s32.totalorder %s112, %s115
    %p124 = scmp.eq.s32.totalorder %s18, 1
    %p125 = por %p123, %p124
    %p126 = scmp.ne.s32.totalorder %s115, %s116
    %p127 = scmp.eq.s32.totalorder %s18, 0
    %p128 = por %p126, %p127
    %p129 = scmp.ne.s32.totalorder %s115, %s116
    %p130 = scmp.eq.s32.totalorder %s19, 1
    %p131 = por %p129, %p130
    %p133 = scmp.ne.s32.totalorder %s116, %s132
    %p134 = scmp.eq.s32.totalorder %s19, 0
    %p135 = por %p133, %p134
    %s136 = ssub.s32 %s13, %s20
    %p137 = scmp.eq.s32.totalorder %s136, 0
    %s139 = sadd.s32 %s138, 1
    %s140 = scalar_select %p137, %s138, %s139
    %p143 = pneg %p137
    %p144 = scmp.eq.s32.totalorder %s13, 1
    %p145 = por %p143, %p144
    %p146 = scmp.ne.s32.totalorder %s138, %s141
    %p147 = scmp.eq.s32.totalorder %s13, 0
    %p148 = por %p146, %p147
    %p149 = scmp.ne.s32.totalorder %s138, %s141
    %p150 = scmp.eq.s32.totalorder %s18, 1
    %p151 = por %p149, %p150
    %p152 = scmp.ne.s32.totalorder %s141, %s142
    %p153 = scmp.eq.s32.totalorder %s18, 0
    %p154 = por %p152, %p153
    %p155 = scmp.ne.s32.totalorder %s141, %s142
    %p156 = scmp.eq.s32.totalorder %s19, 1
    %p157 = por %p155, %p156
    %p159 = scmp.ne.s32.totalorder %s142, %s158
    %p160 = scmp.eq.s32.totalorder %s19, 0
    %p161 = por %p159, %p160
    %s162 = ssub.s32 %s13, %s20
    %p163 = scmp.eq.s32.totalorder %s162, 0
    %s165 = sadd.s32 %s164, 1
    %s166 = scalar_select %p163, %s164, %s165
    %p169 = pneg %p163
    %p170 = scmp.eq.s32.totalorder %s13, 1
    %p171 = por %p169, %p170
    %p172 = scmp.ne.s32.totalorder %s164, %s167
    %p173 = scmp.eq.s32.totalorder %s13, 0
    %p174 = por %p172, %p173
    %p175 = scmp.ne.s32.totalorder %s164, %s167
    %p176 = scmp.eq.s32.totalorder %s18, 1
    %p177 = por %p175, %p176
    %p178 = scmp.ne.s32.totalorder %s167, %s168
    %p179 = scmp.eq.s32.totalorder %s18, 0
    %p180 = por %p178, %p179
    %p181 = scmp.ne.s32.totalorder %s167, %s168
    %p182 = scmp.eq.s32.totalorder %s19, 1
    %p183 = por %p181, %p182
    %p185 = scmp.ne.s32.totalorder %s168, %s184
    %p186 = scmp.eq.s32.totalorder %s19, 0
    %p187 = por %p185, %p186
    %p188 = scmp.le.s32.totalorder 1, %s13
    %p189 = scmp.lt.s32.totalorder %s13, 3
    %p190 = pnand %p188, %p189
    %p191 = pneg %p190
    // Predicated region
    $region9: #{tpu_custom_call.1} parent=5 // pred_check
      _
    $region10: #{tpu_custom_call.1} parent=5 // pred_check_branch
      %193 = sbr.rel (%p190) target = $region12
    $region11: #{tpu_custom_call.1} parent=5 // pred_region
      %s194 = ssub.s32 %s13, 1
      // Predicated region
      $region13: #{tpu_custom_call.1} parent=11 // pred_check
        %p195 = pneg %p60
      $region14: #{tpu_custom_call.1} parent=11 // pred_check_branch
        %197 = sbr.rel (%p195) target = $region16
      $region15: #{tpu_custom_call.1} parent=11 // pred_region
        _
      $region16: #{tpu_custom_call.1} parent=11 // pred_fallthru
        _
      // Predicated region
      $region17: #{tpu_custom_call.1} parent=11 // pred_check
        %p198 = pneg %p81
      $region18: #{tpu_custom_call.1} parent=11 // pred_check_branch
        %200 = sbr.rel (%p198) target = $region20
      $region19: #{tpu_custom_call.1} parent=11 // pred_region
        _
      $region20: #{tpu_custom_call.1} parent=11 // pred_fallthru
        _
      // Predicated region
      $region21: #{tpu_custom_call.1} parent=11 // pred_check
        %p201 = pneg %p102
      $region22: #{tpu_custom_call.1} parent=11 // pred_check_branch
        %203 = sbr.rel (%p201) target = $region24
      $region23: #{tpu_custom_call.1} parent=11 // pred_region
        _
      $region24: #{tpu_custom_call.1} parent=11 // pred_fallthru
        _
    $region12: #{tpu_custom_call.1} parent=5 // pred_fallthru
      _
    %p204 = scmp.lt.s32.totalorder %s13, 2
    // Predicated region
    $region25: #{tpu_custom_call.1} parent=5 // pred_check
      %p205 = pneg %p204
    $region26: #{tpu_custom_call.1} parent=5 // pred_check_branch
      %207 = sbr.rel (%p205) target = $region28
    $region27: #{tpu_custom_call.1} parent=5 // pred_region
      // Predicated region
      $region29: #{tpu_custom_call.1} parent=27 // pred_check
        %p208 = pneg %p33
      $region30: #{tpu_custom_call.1} parent=27 // pred_check_branch
        %210 = sbr.rel (%p208) target = $region32
      $region31: #{tpu_custom_call.1} parent=27 // pred_region
        %s211 = smul.u32 16, %s13
        %p212 = scmp.lt.s32.totalorder %s211, 31
        %s213 = scalar_select %p212, %s211, 31
        %s214 = smul.addr %s213, 8
        %s215 = scalar_lea.vmem %s0, %s214
        %s216 = smul.u32 16, %s13
      $region32: #{tpu_custom_call.1} parent=27 // pred_fallthru
        _
    $region28: #{tpu_custom_call.1} parent=5 // pred_fallthru
      _
    %p217 = scmp.le.s32.totalorder 1, %s13
    %p218 = scmp.lt.s32.totalorder %s13, 3
    %p219 = pnand %p217, %p218
    %p220 = pneg %p219
    // Predicated region
    $region33: #{tpu_custom_call.1} parent=5 // pred_check
      _
    $region34: #{tpu_custom_call.1} parent=5 // pred_check_branch
      %222 = sbr.rel (%p219) target = $region36
    $region35: #{tpu_custom_call.1} parent=5 // pred_region
      %s223 = ssub.s32 %s13, 1
      %s224 = smul.u32 16, %s18
      %p225 = scmp.lt.s32.totalorder %s224, 31
      %s226 = scalar_select %p225, %s224, 31
      %s227 = smul.addr %s226, 8
      %s228 = scalar_lea.vmem %s0, %s227
      %p229 = pneg %p39
      %p230 = pneg %p36
      %p231 = pneg %p60
      %p232 = pneg %p57
      %p233 = pneg %p81
      %p234 = pneg %p78
      %p235 = pneg %p102
      %p236 = pneg %p99
      %p237 = pneg %p128
      %p238 = pneg %p125
      %s239 = smul.u32 16, %s18
      %p240 = scmp.lt.s32.totalorder %s239, 31
      %s241 = scalar_select %p240, %s239, 31
      %s242 = smul.addr %s241, 8
      %s243 = scalar_lea.vmem %s4, %s242
      %p244 = pneg %p154
      %p245 = pneg %p151
      %s246 = smul.u32 16, %s18
      %p247 = scmp.lt.s32.totalorder %s246, 31
      %s248 = scalar_select %p247, %s246, 31
      %s249 = smul.addr %s248, 8
      %s250 = scalar_lea.vmem %s5, %s249
      %p251 = pneg %p180
      %p252 = pneg %p177
      %s253 = smul.u32 16, %s18
      %p254 = scmp.lt.s32.totalorder %s253, 31
      %s255 = scalar_select %p254, %s253, 31
      %s256 = smul.addr %s255, 8
      %s257 = scalar_lea.vmem %s6, %s256
      %s258 = smul.u32 16, %s18
      %p259 = scmp.lt.s32.totalorder %s258, 31
      %s260 = scalar_select %p259, %s258, 31
      %s261 = smul.addr %s260, 8
      %s262 = scalar_lea.vmem %s0, %s261
      %s263 = smul.u32 16, %s18
      %s264 = smul.u32 16, %s18
      %p265 = scmp.lt.s32.totalorder %s264, 31
      %s266 = scalar_select %p265, %s264, 31
      %s267 = smul.addr %s266, 8
      %s268 = scalar_lea.vmem %s4, %s267
      %s269 = smul.u32 16, %s18
      %s270 = smul.u32 16, %s18
      %p271 = scmp.lt.s32.totalorder %s270, 31
      %s272 = scalar_select %p271, %s270, 31
      %s273 = smul.addr %s272, 8
      %s274 = scalar_lea.vmem %s5, %s273
      %s275 = smul.u32 16, %s18
      %s276 = smul.u32 16, %s18
      %p277 = scmp.lt.s32.totalorder %s276, 31
      %s278 = scalar_select %p277, %s276, 31
      %s279 = smul.addr %s278, 8
      %s280 = scalar_lea.vmem %s6, %s279
      %s281 = smul.u32 16, %s18
      %v282 = vld [vmem:[%s262] sm:$0xff]
      %v283 = vld [vmem:[%s262 + $0x8] sm:$0xff]
      %v284 = vld [vmem:[%s262 + $0x10] sm:$0xff]
      %v285 = vld [vmem:[%s262 + $0x18] sm:$0xff]
      %v286 = vld [vmem:[%s262 + $0x20] sm:$0xff]
      %v287 = vld [vmem:[%s262 + $0x28] sm:$0xff]
      %v288 = vld [vmem:[%s262 + $0x30] sm:$0xff]
      %v289 = vld [vmem:[%s262 + $0x38] sm:$0xff]
      %v290 = vld [vmem:[%s262 + $0x40] sm:$0xff]
      %v291 = vld [vmem:[%s262 + $0x48] sm:$0xff]
      %v292 = vld [vmem:[%s262 + $0x50] sm:$0xff]
      %v293 = vld [vmem:[%s262 + $0x58] sm:$0xff]
      %v294 = vld [vmem:[%s262 + $0x60] sm:$0xff]
      %v295 = vld [vmem:[%s262 + $0x68] sm:$0xff]
      %v296 = vld [vmem:[%s262 + $0x70] sm:$0xff]
      %v297 = vld [vmem:[%s262 + $0x78] sm:$0xff]
      %v298 = vld [vmem:[%s1] sm:$0xff]
      %v299 = vld [vmem:[%s1 + $0x8] sm:$0xff]
      %v300 = vld [vmem:[%s1 + $0x10] sm:$0xff]
      %v301 = vld [vmem:[%s1 + $0x18] sm:$0xff]
      %vm302 = vcmask 261120
      %v304 = vsel %vm302, %v282, 0
      %v307 = vsel %vm302, %v283, 0
      %v310 = vsel %vm302, %v284, 0
      %v313 = vsel %vm302, %v285, 0
      %v316 = vsel %vm302, %v286, 0
      %v319 = vsel %vm302, %v287, 0
      %v322 = vsel %vm302, %v288, 0
      %v325 = vsel %vm302, %v289, 0
      %v328 = vsel %vm302, %v290, 0
      %v331 = vsel %vm302, %v291, 0
      %v334 = vsel %vm302, %v292, 0
      %v337 = vsel %vm302, %v293, 0
      %v340 = vsel %vm302, %v294, 0
      %v343 = vsel %vm302, %v295, 0
      %v346 = vsel %vm302, %v296, 0
      %v349 = vsel %vm302, %v297, 0
      %351 = vmatprep.subr.mxu0 0.0
      %352 = vmatpush1.msra.mxu0 0.0
      %353 = vmatprep.subr.mxu0 0.0
      %354 = vmatpush1.msra.mxu0 0.0
      %355 = vmatprep.subr.mxu0 0.0
      %356 = vmatpush1.msra.mxu0 0.0
      %357 = vmatprep.subr.mxu0 0.0
      %358 = vmatpush1.msra.mxu0 0.0
      %359 = vmatprep.subr.mxu0 0.0
      %360 = vmatpush1.msra.mxu0 0.0
      %361 = vmatprep.subr.mxu0 0.0
      %362 = vmatpush1.msra.mxu0 0.0
      %363 = vmatprep.subr.mxu0 0.0
      %364 = vmatpush1.msra.mxu0 0.0
      %365 = vmatprep.subr.mxu0 0.0
      %366 = vmatpush1.msra.mxu0 0.0
      %367 = vmatprep.subr.mxu0 0.0
      %368 = vmatpush1.msra.mxu0 0.0
      %369 = vmatprep.subr.mxu0 0.0
      %370 = vmatpush1.msra.mxu0 0.0
      %371 = vmatprep.subr.mxu0 0.0
      %372 = vmatpush1.msra.mxu0 0.0
      %373 = vmatprep.subr.mxu0 0.0
      %374 = vmatpush1.msra.mxu0 0.0
      %375 = vmatprep.subr.mxu0 0.0
      %376 = vmatpush1.msra.mxu0 %v301
      %377 = vmatprep.subr.mxu0 0.0
      %378 = vmatpush1.msra.mxu0 %v300
      %379 = vmatprep.subr.mxu0 0.0
      %380 = vmatpush1.msra.mxu0 %v299
      %381 = vmatprep.subr.mxu0 0.0
      %382 = vmatpush1.msra.mxu0 %v298
      %383 = vmatprep.subr.mxu0 0.0
      %384 = vmatpush2.msra.mxu0 0.0
      %385 = vmatprep.subr.mxu0 0.0
      %386 = vmatpush2.msra.mxu0 0.0
      %387 = vmatprep.subr.mxu0 0.0
      %388 = vmatpush2.msra.mxu0 0.0
      %389 = vmatprep.subr.mxu0 0.0
      %390 = vmatpush2.msra.mxu0 0.0
      %391 = vmatprep.subr.mxu0 0.0
      %392 = vmatpush2.msra.mxu0 0.0
      %393 = vmatprep.subr.mxu0 0.0
      %394 = vmatpush2.msra.mxu0 0.0
      %395 = vmatprep.subr.mxu0 0.0
      %396 = vmatpush2.msra.mxu0 0.0
      %397 = vmatprep.subr.mxu0 0.0
      %398 = vmatpush2.msra.mxu0 0.0
      %399 = vmatprep.subr.mxu0 0.0
      %400 = vmatpush2.msra.mxu0 0.0
      %401 = vmatprep.subr.mxu0 0.0
      %402 = vmatpush2.msra.mxu0 0.0
      %403 = vmatprep.subr.mxu0 0.0
      %404 = vmatpush2.msra.mxu0 0.0
      %405 = vmatprep.subr.mxu0 0.0
      %406 = vmatpush2.msra.mxu0 0.0
      %407 = vmatprep.subr.mxu0 0.0
      %408 = vmatpush2.msra.mxu0 0.0
      %409 = vmatprep.subr.mxu0 0.0
      %410 = vmatpush2.msra.mxu0 0.0
      %411 = vmatprep.subr.mxu0 0.0
      %412 = vmatpush2.msra.mxu0 0.0
      %413 = vmatprep.subr.mxu0 0.0
      %414 = vmatpush2.msra.mxu0 0.0
      %415 = vmatprep.mubr.f32.mxu0 0.0
      %416 = vmatmul.mubr.f32.gmra.mxu0 %v304
      %v417 = vpop.f32.mrf.mxu0
      %v418 = vadd.f32 0.0, %v417
      %v419 = vpop.f32.mrf.mxu0
      %420 = vmatprep.mubr.f32.mxu0 0.0
      %421 = vmatmul.mubr.f32.gmra.mxu0 %v307
      %v422 = vpop.f32.mrf.mxu0
      %v423 = vadd.f32 0.0, %v422
      %v424 = vpop.f32.mrf.mxu0
      %425 = vmatprep.mubr.f32.mxu0 0.0
      %426 = vmatmul.mubr.f32.gmra.mxu0 %v310
      %v427 = vpop.f32.mrf.mxu0
      %v428 = vadd.f32 0.0, %v427
      %v429 = vpop.f32.mrf.mxu0
      %430 = vmatprep.mubr.f32.mxu0 0.0
      %431 = vmatmul.mubr.f32.gmra.mxu0 %v313
      %v432 = vpop.f32.mrf.mxu0
      %v433 = vadd.f32 0.0, %v432
      %v434 = vpop.f32.mrf.mxu0
      %435 = vmatprep.mubr.f32.mxu0 0.0
      %436 = vmatmul.mubr.f32.gmra.mxu0 %v316
      %v437 = vpop.f32.mrf.mxu0
      %v438 = vadd.f32 0.0, %v437
      %v439 = vpop.f32.mrf.mxu0
      %440 = vmatprep.mubr.f32.mxu0 0.0
      %441 = vmatmul.mubr.f32.gmra.mxu0 %v319
      %v442 = vpop.f32.mrf.mxu0
      %v443 = vadd.f32 0.0, %v442
      %v444 = vpop.f32.mrf.mxu0
      %445 = vmatprep.mubr.f32.mxu0 0.0
      %446 = vmatmul.mubr.f32.gmra.mxu0 %v322
      %v447 = vpop.f32.mrf.mxu0
      %v448 = vadd.f32 0.0, %v447
      %v449 = vpop.f32.mrf.mxu0
      %450 = vmatprep.mubr.f32.mxu0 0.0
      %451 = vmatmul.mubr.f32.gmra.mxu0 %v325
      %v452 = vpop.f32.mrf.mxu0
      %v453 = vadd.f32 0.0, %v452
      %v454 = vpop.f32.mrf.mxu0
      %455 = vmatprep.mubr.f32.mxu0 0.0
      %456 = vmatmul.mubr.f32.gmra.mxu0 %v328
      %v457 = vpop.f32.mrf.mxu0
      %v458 = vadd.f32 0.0, %v457
      %v459 = vpop.f32.mrf.mxu0
      %460 = vmatprep.mubr.f32.mxu0 0.0
      %461 = vmatmul.mubr.f32.gmra.mxu0 %v331
      %v462 = vpop.f32.mrf.mxu0
      %v463 = vadd.f32 0.0, %v462
      %v464 = vpop.f32.mrf.mxu0
      %465 = vmatprep.mubr.f32.mxu0 0.0
      %466 = vmatmul.mubr.f32.gmra.mxu0 %v334
      %v467 = vpop.f32.mrf.mxu0
      %v468 = vadd.f32 0.0, %v467
      %v469 = vpop.f32.mrf.mxu0
      %470 = vmatprep.mubr.f32.mxu0 0.0
      %471 = vmatmul.mubr.f32.gmra.mxu0 %v337
      %v472 = vpop.f32.mrf.mxu0
      %v473 = vadd.f32 0.0, %v472
      %v474 = vpop.f32.mrf.mxu0
      %475 = vmatprep.mubr.f32.mxu0 0.0
      %476 = vmatmul.mubr.f32.gmra.mxu0 %v340
      %v477 = vpop.f32.mrf.mxu0
      %v478 = vadd.f32 0.0, %v477
      %v479 = vpop.f32.mrf.mxu0
      %480 = vmatprep.mubr.f32.mxu0 0.0
      %481 = vmatmul.mubr.f32.gmra.mxu0 %v343
      %v482 = vpop.f32.mrf.mxu0
      %v483 = vadd.f32 0.0, %v482
      %v484 = vpop.f32.mrf.mxu0
      %485 = vmatprep.mubr.f32.mxu0 0.0
      %486 = vmatmul.mubr.f32.gmra.mxu0 %v346
      %v487 = vpop.f32.mrf.mxu0
      %v488 = vadd.f32 0.0, %v487
      %v489 = vpop.f32.mrf.mxu0
      %490 = vmatprep.mubr.f32.mxu0 0.0
      %491 = vmatmul.mubr.f32.gmra.mxu0 %v349
      %v492 = vpop.f32.mrf.mxu0
      %v493 = vadd.f32 0.0, %v492
      %v494 = vpop.f32.mrf.mxu0
      %495 = vdwg.mxu0
      %496 = vst.msk [vmem:[%s268] sm:$0xff] %vm302, %v418
      %497 = vst.msk [vmem:[%s268 + $0x8] sm:$0xff] %vm302, %v423
      %498 = vst.msk [vmem:[%s268 + $0x10] sm:$0xff] %vm302, %v428
      %499 = vst.msk [vmem:[%s268 + $0x18] sm:$0xff] %vm302, %v433
      %500 = vst.msk [vmem:[%s268 + $0x20] sm:$0xff] %vm302, %v438
      %501 = vst.msk [vmem:[%s268 + $0x28] sm:$0xff] %vm302, %v443
      %502 = vst.msk [vmem:[%s268 + $0x30] sm:$0xff] %vm302, %v448
      %503 = vst.msk [vmem:[%s268 + $0x38] sm:$0xff] %vm302, %v453
      %504 = vst.msk [vmem:[%s268 + $0x40] sm:$0xff] %vm302, %v458
      %505 = vst.msk [vmem:[%s268 + $0x48] sm:$0xff] %vm302, %v463
      %506 = vst.msk [vmem:[%s268 + $0x50] sm:$0xff] %vm302, %v468
      %507 = vst.msk [vmem:[%s268 + $0x58] sm:$0xff] %vm302, %v473
      %508 = vst.msk [vmem:[%s268 + $0x60] sm:$0xff] %vm302, %v478
      %509 = vst.msk [vmem:[%s268 + $0x68] sm:$0xff] %vm302, %v483
      %510 = vst.msk [vmem:[%s268 + $0x70] sm:$0xff] %vm302, %v488
      %511 = vst.msk [vmem:[%s268 + $0x78] sm:$0xff] %vm302, %v493
      %v512 = vld [vmem:[%s2] sm:$0xff]
      %v513 = vld [vmem:[%s2 + $0x8] sm:$0xff]
      %v514 = vld [vmem:[%s2 + $0x10] sm:$0xff]
      %v515 = vld [vmem:[%s2 + $0x18] sm:$0xff]
      %v517 = vsel %vm302, %v418, 0
      %v520 = vsel %vm302, %v423, 0
      %v523 = vsel %vm302, %v428, 0
      %v526 = vsel %vm302, %v433, 0
      %v529 = vsel %vm302, %v438, 0
      %v532 = vsel %vm302, %v443, 0
      %v535 = vsel %vm302, %v448, 0
      %v538 = vsel %vm302, %v453, 0
      %v541 = vsel %vm302, %v458, 0
      %v544 = vsel %vm302, %v463, 0
      %v547 = vsel %vm302, %v468, 0
      %v550 = vsel %vm302, %v473, 0
      %v553 = vsel %vm302, %v478, 0
      %v556 = vsel %vm302, %v483, 0
      %v559 = vsel %vm302, %v488, 0
      %v562 = vsel %vm302, %v493, 0
      %564 = vmatprep.subr.mxu0 0.0
      %565 = vmatpush1.msra.mxu0 0.0
      %566 = vmatprep.subr.mxu0 0.0
      %567 = vmatpush1.msra.mxu0 0.0
      %568 = vmatprep.subr.mxu0 0.0
      %569 = vmatpush1.msra.mxu0 0.0
      %570 = vmatprep.subr.mxu0 0.0
      %571 = vmatpush1.msra.mxu0 0.0
      %572 = vmatprep.subr.mxu0 0.0
      %573 = vmatpush1.msra.mxu0 0.0
      %574 = vmatprep.subr.mxu0 0.0
      %575 = vmatpush1.msra.mxu0 0.0
      %576 = vmatprep.subr.mxu0 0.0
      %577 = vmatpush1.msra.mxu0 0.0
      %578 = vmatprep.subr.mxu0 0.0
      %579 = vmatpush1.msra.mxu0 0.0
      %580 = vmatprep.subr.mxu0 0.0
      %581 = vmatpush1.msra.mxu0 0.0
      %582 = vmatprep.subr.mxu0 0.0
      %583 = vmatpush1.msra.mxu0 0.0
      %584 = vmatprep.subr.mxu0 0.0
      %585 = vmatpush1.msra.mxu0 0.0
      %586 = vmatprep.subr.mxu0 0.0
      %587 = vmatpush1.msra.mxu0 0.0
      %588 = vmatprep.subr.mxu0 0.0
      %589 = vmatpush1.msra.mxu0 %v515
      %590 = vmatprep.subr.mxu0 0.0
      %591 = vmatpush1.msra.mxu0 %v514
      %592 = vmatprep.subr.mxu0 0.0
      %593 = vmatpush1.msra.mxu0 %v513
      %594 = vmatprep.subr.mxu0 0.0
      %595 = vmatpush1.msra.mxu0 %v512
      %596 = vmatprep.subr.mxu0 0.0
      %597 = vmatpush2.msra.mxu0 0.0
      %598 = vmatprep.subr.mxu0 0.0
      %599 = vmatpush2.msra.mxu0 0.0
      %600 = vmatprep.subr.mxu0 0.0
      %601 = vmatpush2.msra.mxu0 0.0
      %602 = vmatprep.subr.mxu0 0.0
      %603 = vmatpush2.msra.mxu0 0.0
      %604 = vmatprep.subr.mxu0 0.0
      %605 = vmatpush2.msra.mxu0 0.0
      %606 = vmatprep.subr.mxu0 0.0
      %607 = vmatpush2.msra.mxu0 0.0
      %608 = vmatprep.subr.mxu0 0.0
      %609 = vmatpush2.msra.mxu0 0.0
      %610 = vmatprep.subr.mxu0 0.0
      %611 = vmatpush2.msra.mxu0 0.0
      %612 = vmatprep.subr.mxu0 0.0
      %613 = vmatpush2.msra.mxu0 0.0
      %614 = vmatprep.subr.mxu0 0.0
      %615 = vmatpush2.msra.mxu0 0.0
      %616 = vmatprep.subr.mxu0 0.0
      %617 = vmatpush2.msra.mxu0 0.0
      %618 = vmatprep.subr.mxu0 0.0
      %619 = vmatpush2.msra.mxu0 0.0
      %620 = vmatprep.subr.mxu0 0.0
      %621 = vmatpush2.msra.mxu0 0.0
      %622 = vmatprep.subr.mxu0 0.0
      %623 = vmatpush2.msra.mxu0 0.0
      %624 = vmatprep.subr.mxu0 0.0
      %625 = vmatpush2.msra.mxu0 0.0
      %626 = vmatprep.subr.mxu0 0.0
      %627 = vmatpush2.msra.mxu0 0.0
      %628 = vmatprep.mubr.f32.mxu0 0.0
      %629 = vmatmul.mubr.f32.gmra.mxu0 %v517
      %v630 = vpop.f32.mrf.mxu0
      %v631 = vadd.f32 0.0, %v630
      %v632 = vpop.f32.mrf.mxu0
      %633 = vmatprep.mubr.f32.mxu0 0.0
      %634 = vmatmul.mubr.f32.gmra.mxu0 %v520
      %v635 = vpop.f32.mrf.mxu0
      %v636 = vadd.f32 0.0, %v635
      %v637 = vpop.f32.mrf.mxu0
      %638 = vmatprep.mubr.f32.mxu0 0.0
      %639 = vmatmul.mubr.f32.gmra.mxu0 %v523
      %v640 = vpop.f32.mrf.mxu0
      %v641 = vadd.f32 0.0, %v640
      %v642 = vpop.f32.mrf.mxu0
      %643 = vmatprep.mubr.f32.mxu0 0.0
      %644 = vmatmul.mubr.f32.gmra.mxu0 %v526
      %v645 = vpop.f32.mrf.mxu0
      %v646 = vadd.f32 0.0, %v645
      %v647 = vpop.f32.mrf.mxu0
      %648 = vmatprep.mubr.f32.mxu0 0.0
      %649 = vmatmul.mubr.f32.gmra.mxu0 %v529
      %v650 = vpop.f32.mrf.mxu0
      %v651 = vadd.f32 0.0, %v650
      %v652 = vpop.f32.mrf.mxu0
      %653 = vmatprep.mubr.f32.mxu0 0.0
      %654 = vmatmul.mubr.f32.gmra.mxu0 %v532
      %v655 = vpop.f32.mrf.mxu0
      %v656 = vadd.f32 0.0, %v655
      %v657 = vpop.f32.mrf.mxu0
      %658 = vmatprep.mubr.f32.mxu0 0.0
      %659 = vmatmul.mubr.f32.gmra.mxu0 %v535
      %v660 = vpop.f32.mrf.mxu0
      %v661 = vadd.f32 0.0, %v660
      %v662 = vpop.f32.mrf.mxu0
      %663 = vmatprep.mubr.f32.mxu0 0.0
      %664 = vmatmul.mubr.f32.gmra.mxu0 %v538
      %v665 = vpop.f32.mrf.mxu0
      %v666 = vadd.f32 0.0, %v665
      %v667 = vpop.f32.mrf.mxu0
      %668 = vmatprep.mubr.f32.mxu0 0.0
      %669 = vmatmul.mubr.f32.gmra.mxu0 %v541
      %v670 = vpop.f32.mrf.mxu0
      %v671 = vadd.f32 0.0, %v670
      %v672 = vpop.f32.mrf.mxu0
      %673 = vmatprep.mubr.f32.mxu0 0.0
      %674 = vmatmul.mubr.f32.gmra.mxu0 %v544
      %v675 = vpop.f32.mrf.mxu0
      %v676 = vadd.f32 0.0, %v675
      %v677 = vpop.f32.mrf.mxu0
      %678 = vmatprep.mubr.f32.mxu0 0.0
      %679 = vmatmul.mubr.f32.gmra.mxu0 %v547
      %v680 = vpop.f32.mrf.mxu0
      %v681 = vadd.f32 0.0, %v680
      %v682 = vpop.f32.mrf.mxu0
      %683 = vmatprep.mubr.f32.mxu0 0.0
      %684 = vmatmul.mubr.f32.gmra.mxu0 %v550
      %v685 = vpop.f32.mrf.mxu0
      %v686 = vadd.f32 0.0, %v685
      %v687 = vpop.f32.mrf.mxu0
      %688 = vmatprep.mubr.f32.mxu0 0.0
      %689 = vmatmul.mubr.f32.gmra.mxu0 %v553
      %v690 = vpop.f32.mrf.mxu0
      %v691 = vadd.f32 0.0, %v690
      %v692 = vpop.f32.mrf.mxu0
      %693 = vmatprep.mubr.f32.mxu0 0.0
      %694 = vmatmul.mubr.f32.gmra.mxu0 %v556
      %v695 = vpop.f32.mrf.mxu0
      %v696 = vadd.f32 0.0, %v695
      %v697 = vpop.f32.mrf.mxu0
      %698 = vmatprep.mubr.f32.mxu0 0.0
      %699 = vmatmul.mubr.f32.gmra.mxu0 %v559
      %v700 = vpop.f32.mrf.mxu0
      %v701 = vadd.f32 0.0, %v700
      %v702 = vpop.f32.mrf.mxu0
      %703 = vmatprep.mubr.f32.mxu0 0.0
      %704 = vmatmul.mubr.f32.gmra.mxu0 %v562
      %v705 = vpop.f32.mrf.mxu0
      %v706 = vadd.f32 0.0, %v705
      %v707 = vpop.f32.mrf.mxu0
      %708 = vdwg.mxu0
      %vm709 = vcmask 31744
      %710 = vst.msk [vmem:[%s274] sm:$0xff] %vm709, %v631
      %711 = vst.msk [vmem:[%s274 + $0x8] sm:$0xff] %vm709, %v636
      %712 = vst.msk [vmem:[%s274 + $0x10] sm:$0xff] %vm709, %v641
      %713 = vst.msk [vmem:[%s274 + $0x18] sm:$0xff] %vm709, %v646
      %714 = vst.msk [vmem:[%s274 + $0x20] sm:$0xff] %vm709, %v651
      %715 = vst.msk [vmem:[%s274 + $0x28] sm:$0xff] %vm709, %v656
      %716 = vst.msk [vmem:[%s274 + $0x30] sm:$0xff] %vm709, %v661
      %717 = vst.msk [vmem:[%s274 + $0x38] sm:$0xff] %vm709, %v666
      %718 = vst.msk [vmem:[%s274 + $0x40] sm:$0xff] %vm709, %v671
      %719 = vst.msk [vmem:[%s274 + $0x48] sm:$0xff] %vm709, %v676
      %720 = vst.msk [vmem:[%s274 + $0x50] sm:$0xff] %vm709, %v681
      %721 = vst.msk [vmem:[%s274 + $0x58] sm:$0xff] %vm709, %v686
      %722 = vst.msk [vmem:[%s274 + $0x60] sm:$0xff] %vm709, %v691
      %723 = vst.msk [vmem:[%s274 + $0x68] sm:$0xff] %vm709, %v696
      %724 = vst.msk [vmem:[%s274 + $0x70] sm:$0xff] %vm709, %v701
      %725 = vst.msk [vmem:[%s274 + $0x78] sm:$0xff] %vm709, %v706
      %v726 = vld [vmem:[%s3] sm:$0xff]
      %v727 = vld [vmem:[%s3 + $0x8] sm:$0xff]
      %v728 = vld [vmem:[%s3 + $0x10] sm:$0xff]
      %v729 = vld [vmem:[%s3 + $0x18] sm:$0xff]
      %730 = vmatprep.subr.mxu0 0.0
      %731 = vmatpush1.msra.mxu0 0.0
      %732 = vmatprep.subr.mxu0 0.0
      %733 = vmatpush1.msra.mxu0 0.0
      %734 = vmatprep.subr.mxu0 0.0
      %735 = vmatpush1.msra.mxu0 0.0
      %736 = vmatprep.subr.mxu0 0.0
      %737 = vmatpush1.msra.mxu0 0.0
      %738 = vmatprep.subr.mxu0 0.0
      %739 = vmatpush1.msra.mxu0 0.0
      %740 = vmatprep.subr.mxu0 0.0
      %741 = vmatpush1.msra.mxu0 0.0
      %742 = vmatprep.subr.mxu0 0.0
      %743 = vmatpush1.msra.mxu0 0.0
      %744 = vmatprep.subr.mxu0 0.0
      %745 = vmatpush1.msra.mxu0 0.0
      %746 = vmatprep.subr.mxu0 0.0
      %747 = vmatpush1.msra.mxu0 0.0
      %748 = vmatprep.subr.mxu0 0.0
      %749 = vmatpush1.msra.mxu0 0.0
      %750 = vmatprep.subr.mxu0 0.0
      %751 = vmatpush1.msra.mxu0 0.0
      %752 = vmatprep.subr.mxu0 0.0
      %753 = vmatpush1.msra.mxu0 0.0
      %754 = vmatprep.subr.mxu0 0.0
      %755 = vmatpush1.msra.mxu0 %v729
      %756 = vmatprep.subr.mxu0 0.0
      %757 = vmatpush1.msra.mxu0 %v728
      %758 = vmatprep.subr.mxu0 0.0
      %759 = vmatpush1.msra.mxu0 %v727
      %760 = vmatprep.subr.mxu0 0.0
      %761 = vmatpush1.msra.mxu0 %v726
      %762 = vmatprep.subr.mxu0 0.0
      %763 = vmatpush2.msra.mxu0 0.0
      %764 = vmatprep.subr.mxu0 0.0
      %765 = vmatpush2.msra.mxu0 0.0
      %766 = vmatprep.subr.mxu0 0.0
      %767 = vmatpush2.msra.mxu0 0.0
      %768 = vmatprep.subr.mxu0 0.0
      %769 = vmatpush2.msra.mxu0 0.0
      %770 = vmatprep.subr.mxu0 0.0
      %771 = vmatpush2.msra.mxu0 0.0
      %772 = vmatprep.subr.mxu0 0.0
      %773 = vmatpush2.msra.mxu0 0.0
      %774 = vmatprep.subr.mxu0 0.0
      %775 = vmatpush2.msra.mxu0 0.0
      %776 = vmatprep.subr.mxu0 0.0
      %777 = vmatpush2.msra.mxu0 0.0
      %778 = vmatprep.subr.mxu0 0.0
      %779 = vmatpush2.msra.mxu0 0.0
      %780 = vmatprep.subr.mxu0 0.0
      %781 = vmatpush2.msra.mxu0 0.0
      %782 = vmatprep.subr.mxu0 0.0
      %783 = vmatpush2.msra.mxu0 0.0
      %784 = vmatprep.subr.mxu0 0.0
      %785 = vmatpush2.msra.mxu0 0.0
      %786 = vmatprep.subr.mxu0 0.0
      %787 = vmatpush2.msra.mxu0 0.0
      %788 = vmatprep.subr.mxu0 0.0
      %789 = vmatpush2.msra.mxu0 0.0
      %790 = vmatprep.subr.mxu0 0.0
      %791 = vmatpush2.msra.mxu0 0.0
      %792 = vmatprep.subr.mxu0 0.0
      %793 = vmatpush2.msra.mxu0 0.0
      %794 = vmatprep.mubr.f32.mxu0 0.0
      %795 = vmatmul.mubr.f32.gmra.mxu0 %v517
      %v796 = vpop.f32.mrf.mxu0
      %v797 = vadd.f32 0.0, %v796
      %v798 = vpop.f32.mrf.mxu0
      %799 = vmatprep.mubr.f32.mxu0 0.0
      %800 = vmatmul.mubr.f32.gmra.mxu0 %v520
      %v801 = vpop.f32.mrf.mxu0
      %v802 = vadd.f32 0.0, %v801
      %v803 = vpop.f32.mrf.mxu0
      %804 = vmatprep.mubr.f32.mxu0 0.0
      %805 = vmatmul.mubr.f32.gmra.mxu0 %v523
      %v806 = vpop.f32.mrf.mxu0
      %v807 = vadd.f32 0.0, %v806
      %v808 = vpop.f32.mrf.mxu0
      %809 = vmatprep.mubr.f32.mxu0 0.0
      %810 = vmatmul.mubr.f32.gmra.mxu0 %v526
      %v811 = vpop.f32.mrf.mxu0
      %v812 = vadd.f32 0.0, %v811
      %v813 = vpop.f32.mrf.mxu0
      %814 = vmatprep.mubr.f32.mxu0 0.0
      %815 = vmatmul.mubr.f32.gmra.mxu0 %v529
      %v816 = vpop.f32.mrf.mxu0
      %v817 = vadd.f32 0.0, %v816
      %v818 = vpop.f32.mrf.mxu0
      %819 = vmatprep.mubr.f32.mxu0 0.0
      %820 = vmatmul.mubr.f32.gmra.mxu0 %v532
      %v821 = vpop.f32.mrf.mxu0
      %v822 = vadd.f32 0.0, %v821
      %v823 = vpop.f32.mrf.mxu0
      %824 = vmatprep.mubr.f32.mxu0 0.0
      %825 = vmatmul.mubr.f32.gmra.mxu0 %v535
      %v826 = vpop.f32.mrf.mxu0
      %v827 = vadd.f32 0.0, %v826
      %v828 = vpop.f32.mrf.mxu0
      %829 = vmatprep.mubr.f32.mxu0 0.0
      %830 = vmatmul.mubr.f32.gmra.mxu0 %v538
      %v831 = vpop.f32.mrf.mxu0
      %v832 = vadd.f32 0.0, %v831
      %v833 = vpop.f32.mrf.mxu0
      %834 = vmatprep.mubr.f32.mxu0 0.0
      %835 = vmatmul.mubr.f32.gmra.mxu0 %v541
      %v836 = vpop.f32.mrf.mxu0
      %v837 = vadd.f32 0.0, %v836
      %v838 = vpop.f32.mrf.mxu0
      %839 = vmatprep.mubr.f32.mxu0 0.0
      %840 = vmatmul.mubr.f32.gmra.mxu0 %v544
      %v841 = vpop.f32.mrf.mxu0
      %v842 = vadd.f32 0.0, %v841
      %v843 = vpop.f32.mrf.mxu0
      %844 = vmatprep.mubr.f32.mxu0 0.0
      %845 = vmatmul.mubr.f32.gmra.mxu0 %v547
      %v846 = vpop.f32.mrf.mxu0
      %v847 = vadd.f32 0.0, %v846
      %v848 = vpop.f32.mrf.mxu0
      %849 = vmatprep.mubr.f32.mxu0 0.0
      %850 = vmatmul.mubr.f32.gmra.mxu0 %v550
      %v851 = vpop.f32.mrf.mxu0
      %v852 = vadd.f32 0.0, %v851
      %v853 = vpop.f32.mrf.mxu0
      %854 = vmatprep.mubr.f32.mxu0 0.0
      %855 = vmatmul.mubr.f32.gmra.mxu0 %v553
      %v856 = vpop.f32.mrf.mxu0
      %v857 = vadd.f32 0.0, %v856
      %v858 = vpop.f32.mrf.mxu0
      %859 = vmatprep.mubr.f32.mxu0 0.0
      %860 = vmatmul.mubr.f32.gmra.mxu0 %v556
      %v861 = vpop.f32.mrf.mxu0
      %v862 = vadd.f32 0.0, %v861
      %v863 = vpop.f32.mrf.mxu0
      %864 = vmatprep.mubr.f32.mxu0 0.0
      %865 = vmatmul.mubr.f32.gmra.mxu0 %v559
      %v866 = vpop.f32.mrf.mxu0
      %v867 = vadd.f32 0.0, %v866
      %v868 = vpop.f32.mrf.mxu0
      %869 = vmatprep.mubr.f32.mxu0 0.0
      %870 = vmatmul.mubr.f32.gmra.mxu0 %v562
      %v871 = vpop.f32.mrf.mxu0
      %v872 = vadd.f32 0.0, %v871
      %v873 = vpop.f32.mrf.mxu0
      %874 = vdwg.mxu0
      %875 = vst.msk [vmem:[%s280] sm:$0xff] %vm709, %v797
      %876 = vst.msk [vmem:[%s280 + $0x8] sm:$0xff] %vm709, %v802
      %877 = vst.msk [vmem:[%s280 + $0x10] sm:$0xff] %vm709, %v807
      %878 = vst.msk [vmem:[%s280 + $0x18] sm:$0xff] %vm709, %v812
      %879 = vst.msk [vmem:[%s280 + $0x20] sm:$0xff] %vm709, %v817
      %880 = vst.msk [vmem:[%s280 + $0x28] sm:$0xff] %vm709, %v822
      %881 = vst.msk [vmem:[%s280 + $0x30] sm:$0xff] %vm709, %v827
      %882 = vst.msk [vmem:[%s280 + $0x38] sm:$0xff] %vm709, %v832
      %883 = vst.msk [vmem:[%s280 + $0x40] sm:$0xff] %vm709, %v837
      %884 = vst.msk [vmem:[%s280 + $0x48] sm:$0xff] %vm709, %v842
      %885 = vst.msk [vmem:[%s280 + $0x50] sm:$0xff] %vm709, %v847
      %886 = vst.msk [vmem:[%s280 + $0x58] sm:$0xff] %vm709, %v852
      %887 = vst.msk [vmem:[%s280 + $0x60] sm:$0xff] %vm709, %v857
      %888 = vst.msk [vmem:[%s280 + $0x68] sm:$0xff] %vm709, %v862
      %889 = vst.msk [vmem:[%s280 + $0x70] sm:$0xff] %vm709, %v867
      %890 = vst.msk [vmem:[%s280 + $0x78] sm:$0xff] %vm709, %v872
      %s891 = smul.u32 16, %s18
      %p892 = scmp.lt.s32.totalorder %s891, 31
      %s893 = scalar_select %p892, %s891, 31
      %s894 = smul.addr %s893, 8
      %s895 = scalar_lea.vmem %s4, %s894
      %s896 = smul.u32 16, %s18
      %p897 = scmp.lt.s32.totalorder %s896, 31
      %s898 = scalar_select %p897, %s896, 31
      %s899 = smul.addr %s898, 8
      %s900 = scalar_lea.vmem %s5, %s899
      %s901 = smul.u32 16, %s18
      %p902 = scmp.lt.s32.totalorder %s901, 31
      %s903 = scalar_select %p902, %s901, 31
      %s904 = smul.addr %s903, 8
      %s905 = scalar_lea.vmem %s6, %s904
      // Predicated region
      $region37: #{tpu_custom_call.1} parent=35 // pred_check
        %p906 = pneg %p125
      $region38: #{tpu_custom_call.1} parent=35 // pred_check_branch
        %908 = sbr.rel (%p906) target = $region40
      $region39: #{tpu_custom_call.1} parent=35 // pred_region
        %s909 = smul.u32 16, %s18
      $region40: #{tpu_custom_call.1} parent=35 // pred_fallthru
        _
      // Predicated region
      $region41: #{tpu_custom_call.1} parent=35 // pred_check
        %p910 = pneg %p151
      $region42: #{tpu_custom_call.1} parent=35 // pred_check_branch
        %912 = sbr.rel (%p910) target = $region44
      $region43: #{tpu_custom_call.1} parent=35 // pred_region
        %s913 = smul.u32 16, %s18
      $region44: #{tpu_custom_call.1} parent=35 // pred_fallthru
        _
      // Predicated region
      $region45: #{tpu_custom_call.1} parent=35 // pred_check
        %p914 = pneg %p177
      $region46: #{tpu_custom_call.1} parent=35 // pred_check_branch
        %916 = sbr.rel (%p914) target = $region48
      $region47: #{tpu_custom_call.1} parent=35 // pred_region
        %s917 = smul.u32 16, %s18
      $region48: #{tpu_custom_call.1} parent=35 // pred_fallthru
        _
    $region36: #{tpu_custom_call.1} parent=5 // pred_fallthru
      _
    %p918 = scmp.le.s32.totalorder 2, %s13
    // Predicated region
    $region49: #{tpu_custom_call.1} parent=5 // pred_check
      %p919 = pneg %p918
    $region50: #{tpu_custom_call.1} parent=5 // pred_check_branch
      %921 = sbr.rel (%p919) target = $region52
    $region51: #{tpu_custom_call.1} parent=5 // pred_region
      %s922 = ssub.s32 %s13, 2
      // Predicated region
      $region53: #{tpu_custom_call.1} parent=51 // pred_check
        %p923 = pneg %p131
      $region54: #{tpu_custom_call.1} parent=51 // pred_check_branch
        %925 = sbr.rel (%p923) target = $region56
      $region55: #{tpu_custom_call.1} parent=51 // pred_region
        %s926 = smul.u32 16, %s19
        %p927 = scmp.lt.s32.totalorder %s926, 31
        %s928 = scalar_select %p927, %s926, 31
        %s929 = smul.addr %s928, 8
        %s930 = scalar_lea.vmem %s4, %s929
      $region56: #{tpu_custom_call.1} parent=51 // pred_fallthru
        _
      // Predicated region
      $region57: #{tpu_custom_call.1} parent=51 // pred_check
        %p931 = pneg %p157
      $region58: #{tpu_custom_call.1} parent=51 // pred_check_branch
        %933 = sbr.rel (%p931) target = $region60
      $region59: #{tpu_custom_call.1} parent=51 // pred_region
        %s934 = smul.u32 16, %s19
        %p935 = scmp.lt.s32.totalorder %s934, 31
        %s936 = scalar_select %p935, %s934, 31
        %s937 = smul.addr %s936, 8
        %s938 = scalar_lea.vmem %s5, %s937
      $region60: #{tpu_custom_call.1} parent=51 // pred_fallthru
        _
      // Predicated region
      $region61: #{tpu_custom_call.1} parent=51 // pred_check
        %p939 = pneg %p183
      $region62: #{tpu_custom_call.1} parent=51 // pred_check_branch
        %941 = sbr.rel (%p939) target = $region64
      $region63: #{tpu_custom_call.1} parent=51 // pred_region
        %s942 = smul.u32 16, %s19
        %p943 = scmp.lt.s32.totalorder %s942, 31
        %s944 = scalar_select %p943, %s942, 31
        %s945 = smul.addr %s944, 8
        %s946 = scalar_lea.vmem %s6, %s945
      $region64: #{tpu_custom_call.1} parent=51 // pred_fallthru
        _
    $region52: #{tpu_custom_call.1} parent=5 // pred_fallthru
      _
  $region6: #{tpu_custom_call.1} parent=0 // loop_footer
    %s17 = sadd.s32 1, %s13
  $region7: #{tpu_custom_call.1} parent=0 // loop_footer_branch
    %12 = sbr.rel target = $region3
  $region8: #{tpu_custom_call.1} parent=0 // loop_exit
    _

</llo_original>
